<compile_context>
chip_gen: v7x
topology: tpu7x:2x2x1
jax: 0.10.0
libtpu: 0.0.40
codegen_flags: <defaults>
</compile_context>

<pallas_src>
import functools

import jax
import jax.numpy as jnp
from jax.experimental import pallas as pl
from jax.experimental.pallas import tpu as pltpu

BN_EPS = 1e-5
LANE = 128
SUBLANE = 8


def _round_up(x, m):
    return (x + m - 1) // m * m


def _cdiv(a, b):
    return -(-a // b)


@functools.lru_cache(maxsize=1)
def _tpu_generation():
    """Best-effort TPU generation (5/6/7); defaults to 6 if undetectable."""
    try:
        kind = jax.devices()[0].device_kind.lower()
    except Exception:
        return 6
    for g in (7, 6, 5, 4):
        if f"v{g}" in kind:
            return g
    return 6


@functools.lru_cache(maxsize=1)
def _vmem_cap_bytes():
    """Per-generation VMEM budget for this kernel's scoped allocation."""
    gen = _tpu_generation()
    cap = 48 * 1024 * 1024 if gen >= 7 else 100 * 1024 * 1024  # v7x: 64 MiB physical
    try:  # refine from the hardware query when available
        phys = int(pltpu.get_tpu_info().vmem_capacity_bytes)
        cap = min(cap, int(phys * 0.80))
    except Exception:
        pass
    return cap


def _choose_batch_tile(B, gen):
    """Generation-aware batch tile (rows)."""
    if B <= SUBLANE:
        return _round_up(max(B, 1), SUBLANE)
    if gen >= 7:
        # 2 TensorCores: make the number of batch steps even (>= 2) and tiles <= ~512 rows.
        k = max(1, _cdiv(B, 1024))
        return _round_up(_cdiv(B, 2 * k), SUBLANE)
    if gen == 5:
        # least compute headroom: pick the divisor-friendly tile minimizing padded rows.
        if B < 128:
            return _round_up(B, SUBLANE)
        best_tb, best_waste = None, None
        for tb in (512, 256, 128):
            waste = _cdiv(B, tb) * tb - B
            if best_waste is None or waste < best_waste:
                best_tb, best_waste = tb, waste
        return best_tb
    # v6e: 512-row tiles reach ~85% of HBM roofline; bigger buys almost nothing.
    return 512 if B >= 512 else _round_up(B, SUBLANE)


def _weight_spec(shape, index_map, single_buffer):
    """BlockSpec for a grid-(in)variant operand; request 1 buffer when resident."""
    if single_buffer:
        return pl.BlockSpec(shape, index_map, pipeline_mode=pl.Buffered(1))
    return pl.BlockSpec(shape, index_map)


# ----------------------------------------------------------------------------
# Kernel. Grid = (batch tiles, classifier tiles). BN already folded into w1/b1.
# Features are computed once per batch tile (j == 0), kept in a bf16 VMEM
# scratch, and reused for every classifier tile.
# ----------------------------------------------------------------------------
def _classblock_kernel(x_ref, w1_ref, b1_ref, w2_ref, b2_ref,
                       logits_ref, feat_ref, feat_sc):
    @pl.when(pl.program_id(1) == 0)
    def _():
        # --- add_block: Linear (+ folded eval-mode BatchNorm) ---
        x = x_ref[...].astype(jnp.bfloat16)              # no-op if producer sends bf16
        feat = jnp.dot(x, w1_ref[...],                   # bf16 operands, f32 accumulate
                       preferred_element_type=jnp.float32) + b1_ref[...]
        feat_ref[...] = feat.astype(feat_ref.dtype)
        feat_sc[...] = feat.astype(jnp.bfloat16)
        # TODO(synk): training-mode BatchNorm (batch stats), active Dropout and the
        # optional LeakyReLU (relu=True) path are not implemented; eval semantics only.

    # --- classifier: Linear(linear -> class_num), possibly N-tiled ---
    logits = jnp.dot(feat_sc[...], w2_ref[...],
                     preferred_element_type=jnp.float32) + b2_ref[...]
    logits_ref[...] = logits.astype(logits_ref.dtype)


# ----------------------------------------------------------------------------
# One-time parameter prep: fold BN, pad to MXU-friendly dims, cast weights to bf16.
# ----------------------------------------------------------------------------
def prepare_classblock_params(params):
    w1, b1 = params["w1"], params["b1"]
    gamma, beta = params["gamma"], params["beta"]
    mean, var = params["running_mean"], params["running_var"]
    w2, b2 = params["w2"], params["b2"]

    gen = _tpu_generation()
    D, L = w1.shape
    C = w2.shape[1]
    Dp = _round_up(D, LANE)                      # lane-aligned contraction dim
    Lp = _round_up(L, LANE)
    n_align = 256 if gen >= 6 else 128           # full MXU width for the classifier N dim
    Cp = _round_up(C, n_align)

    # Fold eval-mode BN into the first Linear (per output column).
    scale = gamma * jax.lax.rsqrt(var + BN_EPS)  # (1, L)
    w1_eff = w1 * scale
    b1_eff = (b1 - mean) * scale + beta

    # Zero padding: padded feat columns are exactly 0; padded logits columns are
    # exactly 0; padded x columns hit zero w1 rows. All sliced off in the wrapper.
    w1_eff = jnp.pad(w1_eff, ((0, Dp - D), (0, Lp - L)))
    b1_eff = jnp.pad(b1_eff, ((0, 0), (0, Lp - L)))
    w2_p = jnp.pad(w2, ((0, Lp - L), (0, Cp - C)))
    b2_p = jnp.pad(b2, ((0, 0), (0, Cp - C)))

    return dict(
        w1=w1_eff.astype(jnp.bfloat16),
        b1=b1_eff.astype(jnp.float32),
        w2=w2_p.astype(jnp.bfloat16),
        b2=b2_p.astype(jnp.float32),
        input_dim=int(D),
        linear=int(L),
        class_num=int(C),
    )


# ----------------------------------------------------------------------------
# Forward wrapper: batch-tiled grid, resident weights, padded outputs sliced back.
# ----------------------------------------------------------------------------
@functools.partial(jax.jit,
                   static_argnames=("class_num", "linear", "single_buffer_weights"))
def _forward_impl(x, w1, b1, w2, b2, *, class_num, linear, single_buffer_weights):
    B, D = x.shape
    Dp, Lp = w1.shape
    Cp = w2.shape[1]
    gen = _tpu_generation()
    cap = _vmem_cap_bytes()
    x_bytes = x.dtype.itemsize

    # ---- classifier-dim tiling (only kicks in for very large class counts) ----
    if Lp * Cp * 2 <= cap // 3:
        TN = Cp
    else:
        budget = max(LANE, ((cap // 6) // (Lp * 2)) // LANE * LANE)
        TN = LANE
        for cand in range(LANE, min(Cp, budget) + 1, LANE):
            if Cp % cand == 0:
                TN = cand
    ncls = Cp // TN
    w2_resident = single_buffer_weights and ncls == 1

    # ---- batch tile, shrunk if the VMEM requirement would exceed the budget ----
    TB = _choose_batch_tile(B, gen)

    def vmem_need(tb):
        wbuf = 1 if single_buffer_weights else 2
        w2buf = 1 if w2_resident else 2
        return (wbuf * (Dp * Lp * 2 + Lp * 4)        # w1 + b1 (bf16 / f32)
                + w2buf * (Lp * TN * 2 + TN * 4)     # w2 + b2
                + 2 * tb * Dp * x_bytes              # streamed x (double-buffered)
                + 2 * tb * TN * 4                    # logits tile
                + 2 * tb * Lp * 4                    # features tile
                + tb * Lp * 2)                       # bf16 feature scratch

    while TB > SUBLANE and vmem_need(TB) > cap:
        TB = _round_up(TB // 2, SUBLANE)

    nb = _cdiv(B, TB)
    Bp = nb * TB
    pad_b, pad_d = Bp - B, Dp - D
    xp = jnp.pad(x, ((0, pad_b), (0, pad_d))) if (pad_b or pad_d) else x

    # Advisory cost estimate for XLA's scheduler.
    flops = 2 * Bp * (Dp * Lp + Lp * Cp)
    bytes_accessed = (Bp * Dp * x_bytes + w1.size * 2 + w2.size * 2
                      + (b1.size + b2.size) * 4 + Bp * Lp * 4 + Bp * Cp * 4)
    cost = pl.CostEstimate(flops=flops, transcendentals=0,
                           bytes_accessed=bytes_accessed)

    need = vmem_need(TB)
    vmem_limit = int(min(cap, max(32 * 1024 * 1024, (need * 5) // 4)))

    in_specs = [
        pl.BlockSpec((TB, Dp), lambda i, j: (i, 0)),                       # x: batch-tiled
        _weight_spec((Dp, Lp), lambda i, j: (0, 0), single_buffer_weights),  # w1 resident
        _weight_spec((1, Lp), lambda i, j: (0, 0), single_buffer_weights),   # b1 (BN folded)
        _weight_spec((Lp, TN), lambda i, j: (0, j), w2_resident),            # w2
        _weight_spec((1, TN), lambda i, j: (0, j), w2_resident),             # b2
    ]
    out_specs = (
        pl.BlockSpec((TB, TN), lambda i, j: (i, j)),    # logits
        pl.BlockSpec((TB, Lp), lambda i, j: (i, 0)),    # features (resident across j)
    )

    logits_p, feat_p = pl.pallas_call(
        _classblock_kernel,
        out_shape=(
            jax.ShapeDtypeStruct((Bp, Cp), jnp.float32),   # logits (padded)
            jax.ShapeDtypeStruct((Bp, Lp), jnp.float32),   # features (padded)
        ),
        grid=(nb, ncls),
        in_specs=in_specs,
        out_specs=out_specs,
        scratch_shapes=[pltpu.VMEM((TB, Lp), jnp.bfloat16)],   # bf16 feat reuse buffer
        compiler_params=pltpu.CompilerParams(
            dimension_semantics=("parallel", "arbitrary"),     # batch axis -> megacore
            vmem_limit_bytes=vmem_limit,
        ),
        cost_estimate=cost,
    )(xp, w1, b1, w2, b2)

    return logits_p[:B, :class_num], feat_p[:B, :linear]


# Resolved once: whether this JAX build accepts pipeline_mode=pl.Buffered(1).
_WEIGHT_SINGLE_BUFFER = None


def classblock_forward(x, prep):
    """x: (B, input_dim) f32 or bf16. Returns (logits (B, class_num), features (B, linear))."""
    global _WEIGHT_SINGLE_BUFFER
    args = (x, prep["w1"], prep["b1"], prep["w2"], prep["b2"])
    kw = dict(class_num=prep["class_num"], linear=prep["linear"])
    if _WEIGHT_SINGLE_BUFFER is None:
        try:
            out = _forward_impl(*args, single_buffer_weights=True, **kw)
            jax.block_until_ready(out)
            _WEIGHT_SINGLE_BUFFER = True
            return out
        except Exception:
            _WEIGHT_SINGLE_BUFFER = False   # fall back to default double-buffering
    return _forward_impl(*args, single_buffer_weights=_WEIGHT_SINGLE_BUFFER, **kw)


# ----------------------------------------------------------------------------
# Parameter init mirroring weights_init_kaiming / weights_init_classifier.
# ----------------------------------------------------------------------------
def init_classblock_params(key, input_dim, class_num, linear=512):
    k1, k2, k3 = jax.random.split(key, 3)
    # Linear in add_block: kaiming_normal fan_out -> std = sqrt(2 / linear)
    w1 = jax.random.normal(k1, (input_dim, linear), jnp.float32) * jnp.sqrt(2.0 / linear)
    b1 = jnp.zeros((1, linear), jnp.float32)
    # BatchNorm1d: weight ~ N(1, 0.02), bias = 0, running stats default (0, 1)
    gamma = 1.0 + 0.02 * jax.random.normal(k2, (1, linear), jnp.float32)
    beta = jnp.zeros((1, linear), jnp.float32)
    running_mean = jnp.zeros((1, linear), jnp.float32)
    running_var = jnp.ones((1, linear), jnp.float32)
    # classifier Linear: normal std=0.001, bias 0
    w2 = 0.001 * jax.random.normal(k3, (linear, class_num), jnp.float32)
    b2 = jnp.zeros((1, class_num), jnp.float32)
    return dict(w1=w1, b1=b1, gamma=gamma, beta=beta,
                running_mean=running_mean, running_var=running_var,
                w2=w2, b2=b2)


# Pure-f32 reference (module semantics).
def classblock_reference(x, params):
    h = x @ params["w1"] + params["b1"]
    feat = ((h - params["running_mean"]) / jnp.sqrt(params["running_var"] + BN_EPS)
            * params["gamma"] + params["beta"])
    logits = feat @ params["w2"] + params["b2"]
    return logits, feat


# Mixed-precision reference matching the kernel's bf16-operand / f32-accumulate math.
def classblock_reference_mixed(x, prep):
    Dp = prep["w1"].shape[0]
    xp = jnp.pad(x, ((0, 0), (0, Dp - x.shape[1])))
    h = jnp.dot(xp.astype(jnp.bfloat16), prep["w1"],
                preferred_element_type=jnp.float32) + prep["b1"]
    logits = jnp.dot(h.astype(jnp.bfloat16), prep["w2"],
                     preferred_element_type=jnp.float32) + prep["b2"]
    return logits[:, :prep["class_num"]], h[:, :prep["linear"]]


if __name__ == "__main__":
    key = jax.random.PRNGKey(0)
    kx, kp = jax.random.split(key)

    # Small shapes consistent with the module (linear defaults to 512; a smaller
    # lane-aligned value is used here). class_num=16 / input_dim=64 exercise the
    # pad-to-MXU-width and pad-K paths.
    B, input_dim, linear, class_num = 32, 64, 256, 16
    x = jax.random.normal(kx, (B, input_dim), jnp.float32)
    params = init_classblock_params(kp, input_dim, class_num, linear=linear)
    prep = prepare_classblock_params(params)

    logits, feats = classblock_forward(x, prep)
    jax.block_until_ready((logits, feats))

    assert logits.shape == (B, class_num) and feats.shape == (B, linear)

    # Tight check against a JAX reference using identical bf16/f32 mixed precision.
    ref_logits_mx, ref_feats_mx = classblock_reference_mixed(x, prep)
    assert jnp.allclose(logits, ref_logits_mx, atol=1e-3, rtol=1e-3)
    assert jnp.allclose(feats, ref_feats_mx, atol=1e-3, rtol=1e-3)

    # Looser check against the pure-f32 module reference (bf16 matmul rounding).
    # Note: logits are computed from bf16-rounded features, so logits != feats @ W2
    # at exact f32 precision; acceptable for inference.
    ref_logits, ref_feats = classblock_reference(x, params)
    assert jnp.allclose(logits, ref_logits, atol=5e-3, rtol=5e-2)
    assert jnp.allclose(feats, ref_feats, atol=5e-2, rtol=5e-2)

    print("KERNEL_OK")
</pallas_src>

<mosaic_0001>
module attributes {stable_mosaic.version = 11 : i64} {
  func.func @_classblock_kernel(%arg0: i32, %arg1: i32, %arg2: memref<32x128xf32, #tpu.memory_space<vmem>>, %arg3: memref<128x256xbf16, #tpu.memory_space<vmem>>, %arg4: memref<1x256xf32, #tpu.memory_space<vmem>>, %arg5: memref<256x256xbf16, #tpu.memory_space<vmem>>, %arg6: memref<1x256xf32, #tpu.memory_space<vmem>>, %arg7: memref<32x256xf32, #tpu.memory_space<vmem>>, %arg8: memref<32x256xf32, #tpu.memory_space<vmem>>, %arg9: memref<32x256xbf16, #tpu.memory_space<vmem>>) attributes {dimension_semantics = [#tpu.dimension_semantics<parallel>, #tpu.dimension_semantics<arbitrary>], iteration_bounds = array<i64: 1, 1>, scalar_prefetch = 0 : i64, scratch_operands = 1 : i64, tpu.core_type = #tpu.core_type<tc>, window_params = [{transform_indices = @transform_0, window_bounds = array<i64: 32, 128>}, {pipeline_mode = #tpu.pipeline_mode<synchronous>, transform_indices = @transform_1, window_bounds = array<i64: 128, 256>}, {pipeline_mode = #tpu.pipeline_mode<synchronous>, transform_indices = @transform_2, window_bounds = array<i64: 1, 256>}, {pipeline_mode = #tpu.pipeline_mode<synchronous>, transform_indices = @transform_3, window_bounds = array<i64: 256, 256>}, {pipeline_mode = #tpu.pipeline_mode<synchronous>, transform_indices = @transform_4, window_bounds = array<i64: 1, 256>}, {transform_indices = @transform_5, window_bounds = array<i64: 32, 256>}, {transform_indices = @transform_6, window_bounds = array<i64: 32, 256>}]} {
    %c0_i32 = arith.constant 0 : i32
    %0 = arith.cmpi eq, %arg1, %c0_i32 : i32
    %1 = arith.extui %0 : i1 to i32
    %c0_i32_0 = arith.constant 0 : i32
    %2 = arith.cmpi ne, %1, %c0_i32_0 : i32
    scf.if %2 {
      %c0_8 = arith.constant 0 : index
      %c0_9 = arith.constant 0 : index
      %10 = vector.load %arg2[%c0_8, %c0_9] : memref<32x128xf32, #tpu.memory_space<vmem>>, vector<32x128xf32>
      %11 = arith.truncf %10 : vector<32x128xf32> to vector<32x128xbf16>
      %c0_10 = arith.constant 0 : index
      %c0_11 = arith.constant 0 : index
      %12 = vector.load %arg3[%c0_10, %c0_11] : memref<128x256xbf16, #tpu.memory_space<vmem>>, vector<128x256xbf16>
      %cst_12 = arith.constant dense<0.000000e+00> : vector<32x256xf32>
      %13 = tpu.matmul %11, %12, %cst_12 {dimension_numbers = #tpu.dot_dimension_numbers<[1], [0], [0], [1], [0, 0, 1, 1], [], []>} : vector<32x128xbf16>, vector<128x256xbf16>, vector<32x256xf32> -> vector<32x256xf32>
      %c0_13 = arith.constant 0 : index
      %c0_14 = arith.constant 0 : index
      %14 = vector.load %arg4[%c0_13, %c0_14] : memref<1x256xf32, #tpu.memory_space<vmem>>, vector<1x256xf32>
      %15 = vector.broadcast %14 : vector<1x256xf32> to vector<32x256xf32>
      %16 = arith.addf %13, %15 : vector<32x256xf32>
      %c0_15 = arith.constant 0 : index
      %c0_16 = arith.constant 0 : index
      %17 = vector.load %arg8[%c0_15, %c0_16] : memref<32x256xf32, #tpu.memory_space<vmem>>, vector<32x256xf32>
      tpu.vector_store %arg8[%c0_15, %c0_16], %16 {strides = array<i32>} : memref<32x256xf32, #tpu.memory_space<vmem>>, vector<32x256xf32>,
      %18 = arith.truncf %16 : vector<32x256xf32> to vector<32x256xbf16>
      %c0_17 = arith.constant 0 : index
      %c0_18 = arith.constant 0 : index
      %19 = vector.load %arg9[%c0_17, %c0_18] : memref<32x256xbf16, #tpu.memory_space<vmem>>, vector<32x256xbf16>
      tpu.vector_store %arg9[%c0_17, %c0_18], %18 {strides = array<i32>} : memref<32x256xbf16, #tpu.memory_space<vmem>>, vector<32x256xbf16>,
    } else {
    }
    %c0 = arith.constant 0 : index
    %c0_1 = arith.constant 0 : index
    %3 = vector.load %arg9[%c0, %c0_1] : memref<32x256xbf16, #tpu.memory_space<vmem>>, vector<32x256xbf16>
    %c0_2 = arith.constant 0 : index
    %c0_3 = arith.constant 0 : index
    %4 = vector.load %arg5[%c0_2, %c0_3] : memref<256x256xbf16, #tpu.memory_space<vmem>>, vector<256x256xbf16>
    %cst = arith.constant dense<0.000000e+00> : vector<32x256xf32>
    %5 = tpu.matmul %3, %4, %cst {dimension_numbers = #tpu.dot_dimension_numbers<[1], [0], [0], [1], [0, 0, 1, 1], [], []>} : vector<32x256xbf16>, vector<256x256xbf16>, vector<32x256xf32> -> vector<32x256xf32>
    %c0_4 = arith.constant 0 : index
    %c0_5 = arith.constant 0 : index
    %6 = vector.load %arg6[%c0_4, %c0_5] : memref<1x256xf32, #tpu.memory_space<vmem>>, vector<1x256xf32>
    %7 = vector.broadcast %6 : vector<1x256xf32> to vector<32x256xf32>
    %8 = arith.addf %5, %7 : vector<32x256xf32>
    %c0_6 = arith.constant 0 : index
    %c0_7 = arith.constant 0 : index
    %9 = vector.load %arg7[%c0_6, %c0_7] : memref<32x256xf32, #tpu.memory_space<vmem>>, vector<32x256xf32>
    tpu.vector_store %arg7[%c0_6, %c0_7], %8 {strides = array<i32>} : memref<32x256xf32, #tpu.memory_space<vmem>>, vector<32x256xf32>,
    return
  }
  func.func @transform_0(%arg0: i32, %arg1: i32) -> (i32, i32) {
    %c0_i32 = arith.constant 0 : i32
    %c0_i32_0 = arith.constant 0 : i32
    return %arg0, %c0_i32 : i32, i32
  }
  func.func @transform_1(%arg0: i32, %arg1: i32) -> (i32, i32) {
    %c0_i32 = arith.constant 0 : i32
    %c0_i32_0 = arith.constant 0 : i32
    %c0_i32_1 = arith.constant 0 : i32
    return %c0_i32, %c0_i32_0 : i32, i32
  }
  func.func @transform_2(%arg0: i32, %arg1: i32) -> (i32, i32) {
    %c0_i32 = arith.constant 0 : i32
    %c0_i32_0 = arith.constant 0 : i32
    %c0_i32_1 = arith.constant 0 : i32
    return %c0_i32, %c0_i32_0 : i32, i32
  }
  func.func @transform_3(%arg0: i32, %arg1: i32) -> (i32, i32) {
    %c0_i32 = arith.constant 0 : i32
    %c0_i32_0 = arith.constant 0 : i32
    return %c0_i32, %arg1 : i32, i32
  }
  func.func @transform_4(%arg0: i32, %arg1: i32) -> (i32, i32) {
    %c0_i32 = arith.constant 0 : i32
    %c0_i32_0 = arith.constant 0 : i32
    return %c0_i32, %arg1 : i32, i32
  }
  func.func @transform_5(%arg0: i32, %arg1: i32) -> (i32, i32) {
    %c0_i32 = arith.constant 0 : i32
    return %arg0, %arg1 : i32, i32
  }
  func.func @transform_6(%arg0: i32, %arg1: i32) -> (i32, i32) {
    %c0_i32 = arith.constant 0 : i32
    %c0_i32_0 = arith.constant 0 : i32
    return %arg0, %c0_i32 : i32, i32
  }
}

module attributes {stable_mosaic.version = 11 : i64} {
  func.func @_classblock_kernel(%arg0: i32, %arg1: i32, %arg2: memref<32x128xf32, #tpu.memory_space<vmem>>, %arg3: memref<128x256xbf16, #tpu.memory_space<vmem>>, %arg4: memref<1x256xf32, #tpu.memory_space<vmem>>, %arg5: memref<256x256xbf16, #tpu.memory_space<vmem>>, %arg6: memref<1x256xf32, #tpu.memory_space<vmem>>, %arg7: memref<32x256xf32, #tpu.memory_space<vmem>>, %arg8: memref<32x256xf32, #tpu.memory_space<vmem>>, %arg9: memref<32x256xbf16, #tpu.memory_space<vmem>>) attributes {dimension_semantics = [#tpu.dimension_semantics<parallel>, #tpu.dimension_semantics<arbitrary>], iteration_bounds = array<i64: 1, 1>, scalar_prefetch = 0 : i64, scratch_operands = 1 : i64, tpu.core_type = #tpu.core_type<tc>, window_params = [{transform_indices = @transform_0, window_bounds = array<i64: 32, 128>}, {pipeline_mode = #tpu.pipeline_mode<synchronous>, transform_indices = @transform_1, window_bounds = array<i64: 128, 256>}, {pipeline_mode = #tpu.pipeline_mode<synchronous>, transform_indices = @transform_2, window_bounds = array<i64: 1, 256>}, {transform_indices = @transform_3, window_bounds = array<i64: 256, 256>}, {transform_indices = @transform_4, window_bounds = array<i64: 1, 256>}, {transform_indices = @transform_5, window_bounds = array<i64: 32, 256>}, {transform_indices = @transform_6, window_bounds = array<i64: 32, 256>}]} {
    %c0_i32 = arith.constant 0 : i32
    %0 = arith.cmpi eq, %arg1, %c0_i32 : i32
    %1 = arith.extui %0 : i1 to i32
    %c0_i32_0 = arith.constant 0 : i32
    %2 = arith.cmpi ne, %1, %c0_i32_0 : i32
    scf.if %2 {
      %c0_8 = arith.constant 0 : index
      %c0_9 = arith.constant 0 : index
      %10 = vector.load %arg2[%c0_8, %c0_9] : memref<32x128xf32, #tpu.memory_space<vmem>>, vector<32x128xf32>
      %11 = arith.truncf %10 : vector<32x128xf32> to vector<32x128xbf16>
      %c0_10 = arith.constant 0 : index
      %c0_11 = arith.constant 0 : index
      %12 = vector.load %arg3[%c0_10, %c0_11] : memref<128x256xbf16, #tpu.memory_space<vmem>>, vector<128x256xbf16>
      %cst_12 = arith.constant dense<0.000000e+00> : vector<32x256xf32>
      %13 = tpu.matmul %11, %12, %cst_12 {dimension_numbers = #tpu.dot_dimension_numbers<[1], [0], [0], [1], [0, 0, 1, 1], [], []>} : vector<32x128xbf16>, vector<128x256xbf16>, vector<32x256xf32> -> vector<32x256xf32>
      %c0_13 = arith.constant 0 : index
      %c0_14 = arith.constant 0 : index
      %14 = vector.load %arg4[%c0_13, %c0_14] : memref<1x256xf32, #tpu.memory_space<vmem>>, vector<1x256xf32>
      %15 = vector.broadcast %14 : vector<1x256xf32> to vector<32x256xf32>
      %16 = arith.addf %13, %15 : vector<32x256xf32>
      %c0_15 = arith.constant 0 : index
      %c0_16 = arith.constant 0 : index
      %17 = vector.load %arg8[%c0_15, %c0_16] : memref<32x256xf32, #tpu.memory_space<vmem>>, vector<32x256xf32>
      tpu.vector_store %arg8[%c0_15, %c0_16], %16 {strides = array<i32>} : memref<32x256xf32, #tpu.memory_space<vmem>>, vector<32x256xf32>,
      %18 = arith.truncf %16 : vector<32x256xf32> to vector<32x256xbf16>
      %c0_17 = arith.constant 0 : index
      %c0_18 = arith.constant 0 : index
      %19 = vector.load %arg9[%c0_17, %c0_18] : memref<32x256xbf16, #tpu.memory_space<vmem>>, vector<32x256xbf16>
      tpu.vector_store %arg9[%c0_17, %c0_18], %18 {strides = array<i32>} : memref<32x256xbf16, #tpu.memory_space<vmem>>, vector<32x256xbf16>,
    } else {
    }
    %c0 = arith.constant 0 : index
    %c0_1 = arith.constant 0 : index
    %3 = vector.load %arg9[%c0, %c0_1] : memref<32x256xbf16, #tpu.memory_space<vmem>>, vector<32x256xbf16>
    %c0_2 = arith.constant 0 : index
    %c0_3 = arith.constant 0 : index
    %4 = vector.load %arg5[%c0_2, %c0_3] : memref<256x256xbf16, #tpu.memory_space<vmem>>, vector<256x256xbf16>
    %cst = arith.constant dense<0.000000e+00> : vector<32x256xf32>
    %5 = tpu.matmul %3, %4, %cst {dimension_numbers = #tpu.dot_dimension_numbers<[1], [0], [0], [1], [0, 0, 1, 1], [], []>} : vector<32x256xbf16>, vector<256x256xbf16>, vector<32x256xf32> -> vector<32x256xf32>
    %c0_4 = arith.constant 0 : index
    %c0_5 = arith.constant 0 : index
    %6 = vector.load %arg6[%c0_4, %c0_5] : memref<1x256xf32, #tpu.memory_space<vmem>>, vector<1x256xf32>
    %7 = vector.broadcast %6 : vector<1x256xf32> to vector<32x256xf32>
    %8 = arith.addf %5, %7 : vector<32x256xf32>
    %c0_6 = arith.constant 0 : index
    %c0_7 = arith.constant 0 : index
    %9 = vector.load %arg7[%c0_6, %c0_7] : memref<32x256xf32, #tpu.memory_space<vmem>>, vector<32x256xf32>
    tpu.vector_store %arg7[%c0_6, %c0_7], %8 {strides = array<i32>} : memref<32x256xf32, #tpu.memory_space<vmem>>, vector<32x256xf32>,
    return
  }
  func.func @transform_0(%arg0: i32, %arg1: i32) -> (i32, i32) {
    %c0_i32 = arith.constant 0 : i32
    %c0_i32_0 = arith.constant 0 : i32
    return %arg0, %c0_i32 : i32, i32
  }
  func.func @transform_1(%arg0: i32, %arg1: i32) -> (i32, i32) {
    %c0_i32 = arith.constant 0 : i32
    %c0_i32_0 = arith.constant 0 : i32
    %c0_i32_1 = arith.constant 0 : i32
    return %c0_i32, %c0_i32_0 : i32, i32
  }
  func.func @transform_2(%arg0: i32, %arg1: i32) -> (i32, i32) {
    %c0_i32 = arith.constant 0 : i32
    %c0_i32_0 = arith.constant 0 : i32
    %c0_i32_1 = arith.constant 0 : i32
    return %c0_i32, %c0_i32_0 : i32, i32
  }
  func.func @transform_3(%arg0: i32, %arg1: i32) -> (i32, i32) {
    %c0_i32 = arith.constant 0 : i32
    %c0_i32_0 = arith.constant 0 : i32
    return %c0_i32, %arg1 : i32, i32
  }
  func.func @transform_4(%arg0: i32, %arg1: i32) -> (i32, i32) {
    %c0_i32 = arith.constant 0 : i32
    %c0_i32_0 = arith.constant 0 : i32
    return %c0_i32, %arg1 : i32, i32
  }
  func.func @transform_5(%arg0: i32, %arg1: i32) -> (i32, i32) {
    %c0_i32 = arith.constant 0 : i32
    return %arg0, %arg1 : i32, i32
  }
  func.func @transform_6(%arg0: i32, %arg1: i32) -> (i32, i32) {
    %c0_i32 = arith.constant 0 : i32
    %c0_i32_0 = arith.constant 0 : i32
    return %arg0, %c0_i32 : i32, i32
  }
}

</mosaic_0001>

<llo_original>
// kernel: _forward_impl.1
$region0: #{_forward_impl.1}
  #allocation0 [shape = 'u32[]', space=smem, size = 0x4, offset = 0x4, fixed_abs, tag = 'smem constant byte address 0x4 - core index']
  #allocation1 [shape = 'u32[144,128]{1,0:T(1,128)}', space=vmem, size = 0x12000, scoped, tag = 'internal scratch']
  #allocation2 [shape = 'bf16[32,256]{1,0:T(16,128)(2,1)}', space=vmem, size = 0x4000, scoped, tag = 'scratch operand']
  %s0 = inlined_call_operand.vmem [shape: f32[32,128], index: 0, kind: input, shape index: {}]
  %s1 = inlined_call_operand.hbm [shape: bf16[128,256], index: 1, kind: input, shape index: {}]
  %s2 = inlined_call_operand.vmem [shape: f32[1,256], index: 2, kind: input, shape index: {}]
  %s3 = inlined_call_operand.hbm [shape: bf16[256,256], index: 3, kind: input, shape index: {}]
  %s4 = inlined_call_operand.vmem [shape: f32[1,256], index: 4, kind: input, shape index: {}]
  %s5 = inlined_call_operand.vmem [shape: f32[32,256], index: 5, kind: output, shape index: {0}]
  %s6 = inlined_call_operand.hbm [shape: f32[32,256], index: 6, kind: output, shape index: {1}]
  %7 = xla_tuple %s5, %s6
  %s8 = sld [smem:[#allocation0]]
  $region50: #{_forward_impl.1} parent=0
    _
  %s10 = ssub.s32 1, %s8
  %s11 = scalar_select 0, %s10, %s8
  $region1: #{_forward_impl.1} parent=0
    #allocation3 [shape = 'u8[65536]{0}', space=vmem, size = 0x10000, scoped, tag = 'input window, operand 1, single buffered']
    #allocation4 [shape = 's32[1]{0}', space=sflag, size = 0x4, scoped, tag = 'scoped memory for _forward_impl.1']
    #allocation5 [shape = 's32[1]{0}', space=sflag, size = 0x4, scoped, tag = 'scoped memory for _forward_impl.1']
    #allocation6 [shape = 'u8[131072]{0}', space=vmem, size = 0x20000, scoped, tag = 'input window, operand 3, single buffered']
    #allocation7 [shape = 's32[1]{0}', space=sflag, size = 0x4, scoped, tag = 'scoped memory for _forward_impl.1']
    #allocation8 [shape = 'u8[32768]{0}', space=vmem, size = 0x8000, scoped, tag = 'output window, operand 1, single buffered']
    %12 = vsyncpa [#allocation4], 0
    %13 = vsyncpa [#allocation7], 0
    %14 = vsyncpa [#allocation5], 0
    // Predicated region
    $region2: #{_forward_impl.1} parent=1 // pred_check
      _
    $region3: #{_forward_impl.1} parent=1 // pred_check_branch
      %16 = sbr.rel (0) target = $region5
    $region4: #{_forward_impl.1} parent=1 // pred_region
      _
    $region5: #{_forward_impl.1} parent=1 // pred_fallthru
      _
    // Predicated region
    $region6: #{_forward_impl.1} parent=1 // pred_check
      _
    $region7: #{_forward_impl.1} parent=1 // pred_check_branch
      %18 = sbr.rel (0) target = $region9
    $region8: #{_forward_impl.1} parent=1 // pred_region
      %s20 = ssub.s32 2048, 2048
      %21 = vsyncadd [#allocation4], %s20
      %s22 = sshll.u32 [#allocation3], 4
      %s23 = int_to_ptr.vmem [resolvable:$true] %s22
      %28 = dma.hbm_to_vmem [thread:$0]  %s1, 2048, %s23, [#allocation4], 128, 128, 8
    $region9: #{_forward_impl.1} parent=1 // pred_fallthru
      _
    // Predicated region
    $region10: #{_forward_impl.1} parent=1 // pred_check
      _
    $region11: #{_forward_impl.1} parent=1 // pred_check_branch
      %30 = sbr.rel (0) target = $region13
    $region12: #{_forward_impl.1} parent=1 // pred_region
      _
    $region13: #{_forward_impl.1} parent=1 // pred_fallthru
      _
    // Predicated region
    $region14: #{_forward_impl.1} parent=1 // pred_check
      _
    $region15: #{_forward_impl.1} parent=1 // pred_check_branch
      %32 = sbr.rel (0) target = $region17
    $region16: #{_forward_impl.1} parent=1 // pred_region
      %s34 = ssub.s32 4096, 4096
      %35 = vsyncadd [#allocation7], %s34
      %s36 = sshll.u32 [#allocation6], 4
      %s37 = int_to_ptr.vmem [resolvable:$true] %s36
      %42 = dma.hbm_to_vmem [thread:$0]  %s3, 4096, %s37, [#allocation7], 128, 128, 8
    $region17: #{_forward_impl.1} parent=1 // pred_fallthru
      _
    // Predicated region
    $region18: #{_forward_impl.1} parent=1 // pred_check
      _
    $region19: #{_forward_impl.1} parent=1 // pred_check_branch
      %44 = sbr.rel (0) target = $region21
    $region20: #{_forward_impl.1} parent=1 // pred_region
      _
    $region21: #{_forward_impl.1} parent=1 // pred_fallthru
      _
    // Predicated region
    $region22: #{_forward_impl.1} parent=1 // pred_check
      _
    $region23: #{_forward_impl.1} parent=1 // pred_check_branch
      %46 = sbr.rel (0) target = $region25
    $region24: #{_forward_impl.1} parent=1 // pred_region
      %47 = dma.done [#allocation4], 2048
    $region25: #{_forward_impl.1} parent=1 // pred_fallthru
      _
    // Predicated region
    $region26: #{_forward_impl.1} parent=1 // pred_check
      _
    $region27: #{_forward_impl.1} parent=1 // pred_check_branch
      %49 = sbr.rel (0) target = $region29
    $region28: #{_forward_impl.1} parent=1 // pred_region
      %50 = dma.done [#allocation7], 4096
    $region29: #{_forward_impl.1} parent=1 // pred_fallthru
      _
    %p52 = scmp.eq.s32.totalorder 0, 0
    // Predicated region
    $region30: #{_forward_impl.1} parent=1 // pred_check
      %p53 = pneg %p52
    $region31: #{_forward_impl.1} parent=1 // pred_check_branch
      %55 = sbr.rel (%p53) target = $region33
    $region32: #{_forward_impl.1} parent=1 // pred_region
      %v56 = vld [vmem:[%s0] sm:$0xff]
      %v57 = vld [vmem:[%s0 + $0x8] sm:$0xff]
      %v58 = vld [vmem:[%s0 + $0x10] sm:$0xff]
      %v59 = vld [vmem:[%s0 + $0x18] sm:$0xff]
      %v60 = vpack.c.bf16 %v57, %v56
      %v61 = vpack.c.bf16 %v59, %v58
      %v62 = vld [vmem:[#allocation3] sm:$0xff]
      %v63 = vld [vmem:[#allocation3 + $0x8] sm:$0xff]
      %v64 = vld [vmem:[#allocation3 + $0x10] sm:$0xff]
      %v65 = vld [vmem:[#allocation3 + $0x18] sm:$0xff]
      %v66 = vld [vmem:[#allocation3 + $0x20] sm:$0xff]
      %v67 = vld [vmem:[#allocation3 + $0x28] sm:$0xff]
      %v68 = vld [vmem:[#allocation3 + $0x30] sm:$0xff]
      %v69 = vld [vmem:[#allocation3 + $0x38] sm:$0xff]
      %v70 = vld [vmem:[#allocation3 + $0x40] sm:$0xff]
      %v71 = vld [vmem:[#allocation3 + $0x48] sm:$0xff]
      %v72 = vld [vmem:[#allocation3 + $0x50] sm:$0xff]
      %v73 = vld [vmem:[#allocation3 + $0x58] sm:$0xff]
      %v74 = vld [vmem:[#allocation3 + $0x60] sm:$0xff]
      %v75 = vld [vmem:[#allocation3 + $0x68] sm:$0xff]
      %v76 = vld [vmem:[#allocation3 + $0x70] sm:$0xff]
      %v77 = vld [vmem:[#allocation3 + $0x78] sm:$0xff]
      %v78 = vld [vmem:[%s2] sm:$0x3]
      %v80 = vlaneseq
      %v81 = vshrl.u32 %v80, 7
      %v82 = vsub.s32 0, %v81
      %v83 = vrot.slane %v78, %v82
      %v84 = vlaneseq
      %v85 = vshrl.u32 %v84, 7
      %v86 = vsub.s32 1, %v85
      %v87 = vrot.slane %v78, %v86
      %v106 = vunpack.c.l.b16 %v62
      %v107 = vunpack.c.h.b16 %v62
      %v108 = vunpack.c.l.b16 %v63
      %v109 = vunpack.c.h.b16 %v63
      %v110 = vunpack.c.l.b16 %v64
      %v111 = vunpack.c.h.b16 %v64
      %v112 = vunpack.c.l.b16 %v65
      %v113 = vunpack.c.h.b16 %v65
      %v114 = vunpack.c.l.b16 %v66
      %v115 = vunpack.c.h.b16 %v66
      %v116 = vunpack.c.l.b16 %v67
      %v117 = vunpack.c.h.b16 %v67
      %v118 = vunpack.c.l.b16 %v68
      %v119 = vunpack.c.h.b16 %v68
      %v120 = vunpack.c.l.b16 %v69
      %v121 = vunpack.c.h.b16 %v69
      %v122 = vunpack.c.l.b16 %v70
      %v123 = vunpack.c.h.b16 %v70
      %v124 = vunpack.c.l.b16 %v71
      %v125 = vunpack.c.h.b16 %v71
      %v126 = vunpack.c.l.b16 %v72
      %v127 = vunpack.c.h.b16 %v72
      %v128 = vunpack.c.l.b16 %v73
      %v129 = vunpack.c.h.b16 %v73
      %v130 = vunpack.c.l.b16 %v74
      %v131 = vunpack.c.h.b16 %v74
      %v132 = vunpack.c.l.b16 %v75
      %v133 = vunpack.c.h.b16 %v75
      %v134 = vunpack.c.l.b16 %v76
      %v135 = vunpack.c.h.b16 %v76
      %v136 = vunpack.c.l.b16 %v77
      %v137 = vunpack.c.h.b16 %v77
      %v138 = vpack.c.b16 %v108, %v106
      %v139 = vpack.c.b16 %v109, %v107
      %v140 = vpack.c.b16 %v112, %v110
      %v141 = vpack.c.b16 %v113, %v111
      %v142 = vpack.c.b16 %v116, %v114
      %v143 = vpack.c.b16 %v117, %v115
      %v144 = vpack.c.b16 %v120, %v118
      %v145 = vpack.c.b16 %v121, %v119
      %v146 = vpack.c.b16 %v124, %v122
      %v147 = vpack.c.b16 %v125, %v123
      %v148 = vpack.c.b16 %v128, %v126
      %v149 = vpack.c.b16 %v129, %v127
      %v150 = vpack.c.b16 %v132, %v130
      %v151 = vpack.c.b16 %v133, %v131
      %v152 = vpack.c.b16 %v136, %v134
      %v153 = vpack.c.b16 %v137, %v135
      %170 = vmatprep.subr.bf16.mxu0 %v139
      %171 = vmatpush1.bf16.msra.mxu0 %v138
      %172 = vmatprep.subr.bf16.mxu0 %v141
      %173 = vmatpush1.bf16.msra.mxu0 %v140
      %174 = vmatprep.subr.bf16.mxu0 %v143
      %175 = vmatpush1.bf16.msra.mxu0 %v142
      %176 = vmatprep.subr.bf16.mxu0 %v145
      %177 = vmatpush1.bf16.msra.mxu0 %v144
      %178 = vmatprep.subr.bf16.mxu0 %v147
      %179 = vmatpush1.bf16.msra.mxu0 %v146
      %180 = vmatprep.subr.bf16.mxu0 %v149
      %181 = vmatpush1.bf16.msra.mxu0 %v148
      %182 = vmatprep.subr.bf16.mxu0 %v151
      %183 = vmatpush1.bf16.msra.mxu0 %v150
      %184 = vmatprep.subr.bf16.mxu0 %v153
      %185 = vmatpush1.bf16.msra.mxu0 %v152
      %186 = vmatprep.subr.bf16.mxu0 0
      %187 = vmatpush1.bf16.msra.mxu0 0
      %188 = vmatprep.subr.bf16.mxu0 0
      %189 = vmatpush1.bf16.msra.mxu0 0
      %190 = vmatprep.subr.bf16.mxu0 0
      %191 = vmatpush1.bf16.msra.mxu0 0
      %192 = vmatprep.subr.bf16.mxu0 0
      %193 = vmatpush1.bf16.msra.mxu0 0
      %194 = vmatprep.subr.bf16.mxu0 0
      %195 = vmatpush1.bf16.msra.mxu0 0
      %196 = vmatprep.subr.bf16.mxu0 0
      %197 = vmatpush1.bf16.msra.mxu0 0
      %198 = vmatprep.subr.bf16.mxu0 0
      %199 = vmatpush1.bf16.msra.mxu0 0
      %200 = vmatprep.subr.bf16.mxu0 0
      %201 = vmatpush1.bf16.msra.mxu0 0
      %202 = vmatprep.mubr.bf16.mxu0 0
      %203 = vmatmul.mubr.bf16.gmra.mrb[0].mxu0 %v60
      %v204 = vpop.f32.mrb[0].mxu0
      %v205 = vadd.f32 %v83, %v204
      %v206 = vpop.f32.mrb[0].mxu0
      %v207 = vadd.f32 %v87, %v206
      %v208 = vpop.f32.mrb[0].mxu0
      %v209 = vadd.f32 %v83, %v208
      %v210 = vpop.f32.mrb[0].mxu0
      %v211 = vadd.f32 %v87, %v210
      %212 = vmatprep.mubr.bf16.mxu0 0
      %213 = vmatmul.mubr.bf16.gmra.mrb[0].mxu0 %v61
      %v214 = vpop.f32.mrb[0].mxu0
      %v215 = vadd.f32 %v83, %v214
      %v216 = vpop.f32.mrb[0].mxu0
      %v217 = vadd.f32 %v87, %v216
      %v218 = vpop.f32.mrb[0].mxu0
      %v219 = vadd.f32 %v83, %v218
      %v220 = vpop.f32.mrb[0].mxu0
      %v221 = vadd.f32 %v87, %v220
      %222 = vdwg.mxu0
      %223 = vst [vmem:[#allocation8] sm:$0xff] %v205
      %224 = vst [vmem:[#allocation8 + $0x8] sm:$0xff] %v207
      %225 = vst [vmem:[#allocation8 + $0x10] sm:$0xff] %v209
      %226 = vst [vmem:[#allocation8 + $0x18] sm:$0xff] %v211
      %227 = vst [vmem:[#allocation8 + $0x20] sm:$0xff] %v215
      %228 = vst [vmem:[#allocation8 + $0x28] sm:$0xff] %v217
      %229 = vst [vmem:[#allocation8 + $0x30] sm:$0xff] %v219
      %230 = vst [vmem:[#allocation8 + $0x38] sm:$0xff] %v221
      %v231 = vpack.c.bf16 %v209, %v205
      %v232 = vpack.c.bf16 %v211, %v207
      %v233 = vpack.c.bf16 %v219, %v215
      %v234 = vpack.c.bf16 %v221, %v217
      %235 = vst [vmem:[#allocation2] sm:$0xff] %v231
      %236 = vst [vmem:[#allocation2 + $0x8] sm:$0xff] %v232
      %237 = vst [vmem:[#allocation2 + $0x10] sm:$0xff] %v233
      %238 = vst [vmem:[#allocation2 + $0x18] sm:$0xff] %v234
    $region33: #{_forward_impl.1} parent=1 // pred_fallthru
      _
    %v239 = vld [vmem:[#allocation2] sm:$0xff]
    %v240 = vld [vmem:[#allocation2 + $0x8] sm:$0xff]
    %v241 = vld [vmem:[#allocation2 + $0x10] sm:$0xff]
    %v242 = vld [vmem:[#allocation2 + $0x18] sm:$0xff]
    %v243 = vld [vmem:[#allocation6] sm:$0xff]
    %v244 = vld [vmem:[#allocation6 + $0x8] sm:$0xff]
    %v245 = vld [vmem:[#allocation6 + $0x10] sm:$0xff]
    %v246 = vld [vmem:[#allocation6 + $0x18] sm:$0xff]
    %v247 = vld [vmem:[#allocation6 + $0x20] sm:$0xff]
    %v248 = vld [vmem:[#allocation6 + $0x28] sm:$0xff]
    %v249 = vld [vmem:[#allocation6 + $0x30] sm:$0xff]
    %v250 = vld [vmem:[#allocation6 + $0x38] sm:$0xff]
    %v251 = vld [vmem:[#allocation6 + $0x40] sm:$0xff]
    %v252 = vld [vmem:[#allocation6 + $0x48] sm:$0xff]
    %v253 = vld [vmem:[#allocation6 + $0x50] sm:$0xff]
    %v254 = vld [vmem:[#allocation6 + $0x58] sm:$0xff]
    %v255 = vld [vmem:[#allocation6 + $0x60] sm:$0xff]
    %v256 = vld [vmem:[#allocation6 + $0x68] sm:$0xff]
    %v257 = vld [vmem:[#allocation6 + $0x70] sm:$0xff]
    %v258 = vld [vmem:[#allocation6 + $0x78] sm:$0xff]
    %v259 = vld [vmem:[#allocation6 + $0x80] sm:$0xff]
    %v260 = vld [vmem:[#allocation6 + $0x88] sm:$0xff]
    %v261 = vld [vmem:[#allocation6 + $0x90] sm:$0xff]
    %v262 = vld [vmem:[#allocation6 + $0x98] sm:$0xff]
    %v263 = vld [vmem:[#allocation6 + $0xa0] sm:$0xff]
    %v264 = vld [vmem:[#allocation6 + $0xa8] sm:$0xff]
    %v265 = vld [vmem:[#allocation6 + $0xb0] sm:$0xff]
    %v266 = vld [vmem:[#allocation6 + $0xb8] sm:$0xff]
    %v267 = vld [vmem:[#allocation6 + $0xc0] sm:$0xff]
    %v268 = vld [vmem:[#allocation6 + $0xc8] sm:$0xff]
    %v269 = vld [vmem:[#allocation6 + $0xd0] sm:$0xff]
    %v270 = vld [vmem:[#allocation6 + $0xd8] sm:$0xff]
    %v271 = vld [vmem:[#allocation6 + $0xe0] sm:$0xff]
    %v272 = vld [vmem:[#allocation6 + $0xe8] sm:$0xff]
    %v273 = vld [vmem:[#allocation6 + $0xf0] sm:$0xff]
    %v274 = vld [vmem:[#allocation6 + $0xf8] sm:$0xff]
    %v275 = vld [vmem:[%s4] sm:$0x3]
    %v277 = vlaneseq
    %v278 = vshrl.u32 %v277, 7
    %v279 = vsub.s32 0, %v278
    %v280 = vrot.slane %v275, %v279
    %v281 = vlaneseq
    %v282 = vshrl.u32 %v281, 7
    %v283 = vsub.s32 1, %v282
    %v284 = vrot.slane %v275, %v283
    %v319 = vunpack.c.l.b16 %v243
    %v320 = vunpack.c.h.b16 %v243
    %v321 = vunpack.c.l.b16 %v244
    %v322 = vunpack.c.h.b16 %v244
    %v323 = vunpack.c.l.b16 %v245
    %v324 = vunpack.c.h.b16 %v245
    %v325 = vunpack.c.l.b16 %v246
    %v326 = vunpack.c.h.b16 %v246
    %v327 = vunpack.c.l.b16 %v247
    %v328 = vunpack.c.h.b16 %v247
    %v329 = vunpack.c.l.b16 %v248
    %v330 = vunpack.c.h.b16 %v248
    %v331 = vunpack.c.l.b16 %v249
    %v332 = vunpack.c.h.b16 %v249
    %v333 = vunpack.c.l.b16 %v250
    %v334 = vunpack.c.h.b16 %v250
    %v335 = vunpack.c.l.b16 %v251
    %v336 = vunpack.c.h.b16 %v251
    %v337 = vunpack.c.l.b16 %v252
    %v338 = vunpack.c.h.b16 %v252
    %v339 = vunpack.c.l.b16 %v253
    %v340 = vunpack.c.h.b16 %v253
    %v341 = vunpack.c.l.b16 %v254
    %v342 = vunpack.c.h.b16 %v254
    %v343 = vunpack.c.l.b16 %v255
    %v344 = vunpack.c.h.b16 %v255
    %v345 = vunpack.c.l.b16 %v256
    %v346 = vunpack.c.h.b16 %v256
    %v347 = vunpack.c.l.b16 %v257
    %v348 = vunpack.c.h.b16 %v257
    %v349 = vunpack.c.l.b16 %v258
    %v350 = vunpack.c.h.b16 %v258
    %v351 = vunpack.c.l.b16 %v259
    %v352 = vunpack.c.h.b16 %v259
    %v353 = vunpack.c.l.b16 %v260
    %v354 = vunpack.c.h.b16 %v260
    %v355 = vunpack.c.l.b16 %v261
    %v356 = vunpack.c.h.b16 %v261
    %v357 = vunpack.c.l.b16 %v262
    %v358 = vunpack.c.h.b16 %v262
    %v359 = vunpack.c.l.b16 %v263
    %v360 = vunpack.c.h.b16 %v263
    %v361 = vunpack.c.l.b16 %v264
    %v362 = vunpack.c.h.b16 %v264
    %v363 = vunpack.c.l.b16 %v265
    %v364 = vunpack.c.h.b16 %v265
    %v365 = vunpack.c.l.b16 %v266
    %v366 = vunpack.c.h.b16 %v266
    %v367 = vunpack.c.l.b16 %v267
    %v368 = vunpack.c.h.b16 %v267
    %v369 = vunpack.c.l.b16 %v268
    %v370 = vunpack.c.h.b16 %v268
    %v371 = vunpack.c.l.b16 %v269
    %v372 = vunpack.c.h.b16 %v269
    %v373 = vunpack.c.l.b16 %v270
    %v374 = vunpack.c.h.b16 %v270
    %v375 = vunpack.c.l.b16 %v271
    %v376 = vunpack.c.h.b16 %v271
    %v377 = vunpack.c.l.b16 %v272
    %v378 = vunpack.c.h.b16 %v272
    %v379 = vunpack.c.l.b16 %v273
    %v380 = vunpack.c.h.b16 %v273
    %v381 = vunpack.c.l.b16 %v274
    %v382 = vunpack.c.h.b16 %v274
    %v383 = vpack.c.b16 %v321, %v319
    %v384 = vpack.c.b16 %v322, %v320
    %v385 = vpack.c.b16 %v325, %v323
    %v386 = vpack.c.b16 %v326, %v324
    %v387 = vpack.c.b16 %v329, %v327
    %v388 = vpack.c.b16 %v330, %v328
    %v389 = vpack.c.b16 %v333, %v331
    %v390 = vpack.c.b16 %v334, %v332
    %v391 = vpack.c.b16 %v337, %v335
    %v392 = vpack.c.b16 %v338, %v336
    %v393 = vpack.c.b16 %v341, %v339
    %v394 = vpack.c.b16 %v342, %v340
    %v395 = vpack.c.b16 %v345, %v343
    %v396 = vpack.c.b16 %v346, %v344
    %v397 = vpack.c.b16 %v349, %v347
    %v398 = vpack.c.b16 %v350, %v348
    %v399 = vpack.c.b16 %v353, %v351
    %v400 = vpack.c.b16 %v354, %v352
    %v401 = vpack.c.b16 %v357, %v355
    %v402 = vpack.c.b16 %v358, %v356
    %v403 = vpack.c.b16 %v361, %v359
    %v404 = vpack.c.b16 %v362, %v360
    %v405 = vpack.c.b16 %v365, %v363
    %v406 = vpack.c.b16 %v366, %v364
    %v407 = vpack.c.b16 %v369, %v367
    %v408 = vpack.c.b16 %v370, %v368
    %v409 = vpack.c.b16 %v373, %v371
    %v410 = vpack.c.b16 %v374, %v372
    %v411 = vpack.c.b16 %v377, %v375
    %v412 = vpack.c.b16 %v378, %v376
    %v413 = vpack.c.b16 %v381, %v379
    %v414 = vpack.c.b16 %v382, %v380
    %447 = vmatprep.subr.bf16.mxu0 %v384
    %448 = vmatpush1.bf16.msra.mxu0 %v383
    %449 = vmatprep.subr.bf16.mxu0 %v386
    %450 = vmatpush1.bf16.msra.mxu0 %v385
    %451 = vmatprep.subr.bf16.mxu0 %v388
    %452 = vmatpush1.bf16.msra.mxu0 %v387
    %453 = vmatprep.subr.bf16.mxu0 %v390
    %454 = vmatpush1.bf16.msra.mxu0 %v389
    %455 = vmatprep.subr.bf16.mxu0 %v392
    %456 = vmatpush1.bf16.msra.mxu0 %v391
    %457 = vmatprep.subr.bf16.mxu0 %v394
    %458 = vmatpush1.bf16.msra.mxu0 %v393
    %459 = vmatprep.subr.bf16.mxu0 %v396
    %460 = vmatpush1.bf16.msra.mxu0 %v395
    %461 = vmatprep.subr.bf16.mxu0 %v398
    %462 = vmatpush1.bf16.msra.mxu0 %v397
    %463 = vmatprep.subr.bf16.mxu0 %v400
    %464 = vmatpush1.bf16.msra.mxu0 %v399
    %465 = vmatprep.subr.bf16.mxu0 %v402
    %466 = vmatpush1.bf16.msra.mxu0 %v401
    %467 = vmatprep.subr.bf16.mxu0 %v404
    %468 = vmatpush1.bf16.msra.mxu0 %v403
    %469 = vmatprep.subr.bf16.mxu0 %v406
    %470 = vmatpush1.bf16.msra.mxu0 %v405
    %471 = vmatprep.subr.bf16.mxu0 %v408
    %472 = vmatpush1.bf16.msra.mxu0 %v407
    %473 = vmatprep.subr.bf16.mxu0 %v410
    %474 = vmatpush1.bf16.msra.mxu0 %v409
    %475 = vmatprep.subr.bf16.mxu0 %v412
    %476 = vmatpush1.bf16.msra.mxu0 %v411
    %477 = vmatprep.subr.bf16.mxu0 %v414
    %478 = vmatpush1.bf16.msra.mxu0 %v413
    %479 = vmatprep.mubr.bf16.mxu0 %v240
    %480 = vmatmul.mubr.bf16.gmra.mrb[0].mxu0 %v239
    %v481 = vpop.f32.mrb[0].mxu0
    %v482 = vadd.f32 %v280, %v481
    %v483 = vpop.f32.mrb[0].mxu0
    %v484 = vadd.f32 %v284, %v483
    %v485 = vpop.f32.mrb[0].mxu0
    %v486 = vadd.f32 %v280, %v485
    %v487 = vpop.f32.mrb[0].mxu0
    %v488 = vadd.f32 %v284, %v487
    %489 = vmatprep.mubr.bf16.mxu0 %v242
    %490 = vmatmul.mubr.bf16.gmra.mrb[0].mxu0 %v241
    %v491 = vpop.f32.mrb[0].mxu0
    %v492 = vadd.f32 %v280, %v491
    %v493 = vpop.f32.mrb[0].mxu0
    %v494 = vadd.f32 %v284, %v493
    %v495 = vpop.f32.mrb[0].mxu0
    %v496 = vadd.f32 %v280, %v495
    %v497 = vpop.f32.mrb[0].mxu0
    %v498 = vadd.f32 %v284, %v497
    %499 = vdwg.mxu0
    %500 = vst [vmem:[%s5] sm:$0xff] %v482
    %501 = vst [vmem:[%s5 + $0x8] sm:$0xff] %v484
    %502 = vst [vmem:[%s5 + $0x10] sm:$0xff] %v486
    %503 = vst [vmem:[%s5 + $0x18] sm:$0xff] %v488
    %504 = vst [vmem:[%s5 + $0x20] sm:$0xff] %v492
    %505 = vst [vmem:[%s5 + $0x28] sm:$0xff] %v494
    %506 = vst [vmem:[%s5 + $0x30] sm:$0xff] %v496
    %507 = vst [vmem:[%s5 + $0x38] sm:$0xff] %v498
    // Predicated region
    $region34: #{_forward_impl.1} parent=1 // pred_check
      _
    $region35: #{_forward_impl.1} parent=1 // pred_check_branch
      %509 = sbr.rel (0) target = $region37
    $region36: #{_forward_impl.1} parent=1 // pred_region
      _
    $region37: #{_forward_impl.1} parent=1 // pred_fallthru
      _
    // Predicated region
    $region38: #{_forward_impl.1} parent=1 // pred_check
      _
    $region39: #{_forward_impl.1} parent=1 // pred_check_branch
      %511 = sbr.rel (0) target = $region41
    $region40: #{_forward_impl.1} parent=1 // pred_region
      %s513 = ssub.s32 1024, 1024
      %514 = vsyncadd [#allocation5], %s513
      %s515 = sshll.u32 [#allocation8], 4
      %s516 = int_to_ptr.vmem [resolvable:$true] %s515
      %521 = dma.vmem_to_hbm [thread:$0]  %s516, 1024, %s6, [#allocation5], 256, 256, 16
    $region41: #{_forward_impl.1} parent=1 // pred_fallthru
      _
    // Predicated region
    $region42: #{_forward_impl.1} parent=1 // pred_check
      _
    $region43: #{_forward_impl.1} parent=1 // pred_check_branch
      %523 = sbr.rel (0) target = $region45
    $region44: #{_forward_impl.1} parent=1 // pred_region
      _
    $region45: #{_forward_impl.1} parent=1 // pred_fallthru
      _
    // Predicated region
    $region46: #{_forward_impl.1} parent=1 // pred_check
      _
    $region47: #{_forward_impl.1} parent=1 // pred_check_branch
      %525 = sbr.rel (0) target = $region49
    $region48: #{_forward_impl.1} parent=1 // pred_region
      %526 = dma.done [#allocation5], 1024
    $region49: #{_forward_impl.1} parent=1 // pred_fallthru
      _
    %527 = vsyncpa [#allocation4], 1
    %528 = vsyncpa [#allocation7], 1
    %529 = vsyncpa [#allocation5], 1

// kernel: _forward_impl.1
$region0: #{_forward_impl.1}
  #allocation0 [shape = 'u32[]', space=smem, size = 0x4, offset = 0x4, fixed_abs, tag = 'smem constant byte address 0x4 - core index']
  #allocation1 [shape = 'u32[144,128]{1,0:T(1,128)}', space=vmem, size = 0x12000, scoped, tag = 'internal scratch']
  #allocation2 [shape = 'bf16[32,256]{1,0:T(16,128)(2,1)}', space=vmem, size = 0x4000, scoped, tag = 'scratch operand']
  %s0 = inlined_call_operand.vmem [shape: f32[32,128], index: 0, kind: input, shape index: {}]
  %s1 = inlined_call_operand.hbm [shape: bf16[128,256], index: 1, kind: input, shape index: {}]
  %s2 = inlined_call_operand.vmem [shape: f32[1,256], index: 2, kind: input, shape index: {}]
  %s3 = inlined_call_operand.hbm [shape: bf16[256,256], index: 3, kind: input, shape index: {}]
  %s4 = inlined_call_operand.vmem [shape: f32[1,256], index: 4, kind: input, shape index: {}]
  %s5 = inlined_call_operand.vmem [shape: f32[32,256], index: 5, kind: output, shape index: {0}]
  %s6 = inlined_call_operand.hbm [shape: f32[32,256], index: 6, kind: output, shape index: {1}]
  %7 = xla_tuple %s5, %s6
  %s8 = sld [smem:[#allocation0]]
  $region50: #{_forward_impl.1} parent=0
    _
  %s10 = ssub.s32 1, %s8
  %s11 = scalar_select 0, %s10, %s8
  $region1: #{_forward_impl.1} parent=0
    #allocation3 [shape = 'u8[65536]{0}', space=vmem, size = 0x10000, scoped, tag = 'input window, operand 1, single buffered']
    #allocation4 [shape = 's32[1]{0}', space=sflag, size = 0x4, scoped, tag = 'scoped memory for _forward_impl.1']
    #allocation5 [shape = 's32[1]{0}', space=sflag, size = 0x4, scoped, tag = 'scoped memory for _forward_impl.1']
    #allocation6 [shape = 'u8[131072]{0}', space=vmem, size = 0x20000, scoped, tag = 'input window, operand 3, single buffered']
    #allocation7 [shape = 's32[1]{0}', space=sflag, size = 0x4, scoped, tag = 'scoped memory for _forward_impl.1']
    #allocation8 [shape = 'u8[32768]{0}', space=vmem, size = 0x8000, scoped, tag = 'output window, operand 1, single buffered']
    %12 = vsyncpa [#allocation4], 0
    %13 = vsyncpa [#allocation7], 0
    %14 = vsyncpa [#allocation5], 0
    // Predicated region
    $region2: #{_forward_impl.1} parent=1 // pred_check
      _
    $region3: #{_forward_impl.1} parent=1 // pred_check_branch
      %16 = sbr.rel (0) target = $region5
    $region4: #{_forward_impl.1} parent=1 // pred_region
      _
    $region5: #{_forward_impl.1} parent=1 // pred_fallthru
      _
    // Predicated region
    $region6: #{_forward_impl.1} parent=1 // pred_check
      _
    $region7: #{_forward_impl.1} parent=1 // pred_check_branch
      %18 = sbr.rel (0) target = $region9
    $region8: #{_forward_impl.1} parent=1 // pred_region
      %s20 = ssub.s32 2048, 2048
      %21 = vsyncadd [#allocation4], %s20
      %s22 = sshll.u32 [#allocation3], 4
      %s23 = int_to_ptr.vmem [resolvable:$true] %s22
      %28 = dma.hbm_to_vmem [thread:$0]  %s1, 2048, %s23, [#allocation4], 128, 128, 8
    $region9: #{_forward_impl.1} parent=1 // pred_fallthru
      _
    // Predicated region
    $region10: #{_forward_impl.1} parent=1 // pred_check
      _
    $region11: #{_forward_impl.1} parent=1 // pred_check_branch
      %30 = sbr.rel (0) target = $region13
    $region12: #{_forward_impl.1} parent=1 // pred_region
      _
    $region13: #{_forward_impl.1} parent=1 // pred_fallthru
      _
    // Predicated region
    $region14: #{_forward_impl.1} parent=1 // pred_check
      _
    $region15: #{_forward_impl.1} parent=1 // pred_check_branch
      %32 = sbr.rel (0) target = $region17
    $region16: #{_forward_impl.1} parent=1 // pred_region
      %s34 = ssub.s32 4096, 4096
      %35 = vsyncadd [#allocation7], %s34
      %s36 = sshll.u32 [#allocation6], 4
      %s37 = int_to_ptr.vmem [resolvable:$true] %s36
      %42 = dma.hbm_to_vmem [thread:$0]  %s3, 4096, %s37, [#allocation7], 128, 128, 8
    $region17: #{_forward_impl.1} parent=1 // pred_fallthru
      _
    // Predicated region
    $region18: #{_forward_impl.1} parent=1 // pred_check
      _
    $region19: #{_forward_impl.1} parent=1 // pred_check_branch
      %44 = sbr.rel (0) target = $region21
    $region20: #{_forward_impl.1} parent=1 // pred_region
      _
    $region21: #{_forward_impl.1} parent=1 // pred_fallthru
      _
    // Predicated region
    $region22: #{_forward_impl.1} parent=1 // pred_check
      _
    $region23: #{_forward_impl.1} parent=1 // pred_check_branch
      %46 = sbr.rel (0) target = $region25
    $region24: #{_forward_impl.1} parent=1 // pred_region
      %47 = dma.done [#allocation4], 2048
    $region25: #{_forward_impl.1} parent=1 // pred_fallthru
      _
    // Predicated region
    $region26: #{_forward_impl.1} parent=1 // pred_check
      _
    $region27: #{_forward_impl.1} parent=1 // pred_check_branch
      %49 = sbr.rel (0) target = $region29
    $region28: #{_forward_impl.1} parent=1 // pred_region
      %50 = dma.done [#allocation7], 4096
    $region29: #{_forward_impl.1} parent=1 // pred_fallthru
      _
    %p52 = scmp.eq.s32.totalorder 0, 0
    // Predicated region
    $region30: #{_forward_impl.1} parent=1 // pred_check
      %p53 = pneg %p52
    $region31: #{_forward_impl.1} parent=1 // pred_check_branch
      %55 = sbr.rel (%p53) target = $region33
    $region32: #{_forward_impl.1} parent=1 // pred_region
      %v56 = vld [vmem:[%s0] sm:$0xff]
      %v57 = vld [vmem:[%s0 + $0x8] sm:$0xff]
      %v58 = vld [vmem:[%s0 + $0x10] sm:$0xff]
      %v59 = vld [vmem:[%s0 + $0x18] sm:$0xff]
      %v60 = vpack.c.bf16 %v57, %v56
      %v61 = vpack.c.bf16 %v59, %v58
      %v62 = vld [vmem:[#allocation3] sm:$0xff]
      %v63 = vld [vmem:[#allocation3 + $0x8] sm:$0xff]
      %v64 = vld [vmem:[#allocation3 + $0x10] sm:$0xff]
      %v65 = vld [vmem:[#allocation3 + $0x18] sm:$0xff]
      %v66 = vld [vmem:[#allocation3 + $0x20] sm:$0xff]
      %v67 = vld [vmem:[#allocation3 + $0x28] sm:$0xff]
      %v68 = vld [vmem:[#allocation3 + $0x30] sm:$0xff]
      %v69 = vld [vmem:[#allocation3 + $0x38] sm:$0xff]
      %v70 = vld [vmem:[#allocation3 + $0x40] sm:$0xff]
      %v71 = vld [vmem:[#allocation3 + $0x48] sm:$0xff]
      %v72 = vld [vmem:[#allocation3 + $0x50] sm:$0xff]
      %v73 = vld [vmem:[#allocation3 + $0x58] sm:$0xff]
      %v74 = vld [vmem:[#allocation3 + $0x60] sm:$0xff]
      %v75 = vld [vmem:[#allocation3 + $0x68] sm:$0xff]
      %v76 = vld [vmem:[#allocation3 + $0x70] sm:$0xff]
      %v77 = vld [vmem:[#allocation3 + $0x78] sm:$0xff]
      %v78 = vld [vmem:[%s2] sm:$0x3]
      %v80 = vlaneseq
      %v81 = vshrl.u32 %v80, 7
      %v82 = vsub.s32 0, %v81
      %v83 = vrot.slane %v78, %v82
      %v84 = vlaneseq
      %v85 = vshrl.u32 %v84, 7
      %v86 = vsub.s32 1, %v85
      %v87 = vrot.slane %v78, %v86
      %v106 = vunpack.c.l.b16 %v62
      %v107 = vunpack.c.h.b16 %v62
      %v108 = vunpack.c.l.b16 %v63
      %v109 = vunpack.c.h.b16 %v63
      %v110 = vunpack.c.l.b16 %v64
      %v111 = vunpack.c.h.b16 %v64
      %v112 = vunpack.c.l.b16 %v65
      %v113 = vunpack.c.h.b16 %v65
      %v114 = vunpack.c.l.b16 %v66
      %v115 = vunpack.c.h.b16 %v66
      %v116 = vunpack.c.l.b16 %v67
      %v117 = vunpack.c.h.b16 %v67
      %v118 = vunpack.c.l.b16 %v68
      %v119 = vunpack.c.h.b16 %v68
      %v120 = vunpack.c.l.b16 %v69
      %v121 = vunpack.c.h.b16 %v69
      %v122 = vunpack.c.l.b16 %v70
      %v123 = vunpack.c.h.b16 %v70
      %v124 = vunpack.c.l.b16 %v71
      %v125 = vunpack.c.h.b16 %v71
      %v126 = vunpack.c.l.b16 %v72
      %v127 = vunpack.c.h.b16 %v72
      %v128 = vunpack.c.l.b16 %v73
      %v129 = vunpack.c.h.b16 %v73
      %v130 = vunpack.c.l.b16 %v74
      %v131 = vunpack.c.h.b16 %v74
      %v132 = vunpack.c.l.b16 %v75
      %v133 = vunpack.c.h.b16 %v75
      %v134 = vunpack.c.l.b16 %v76
      %v135 = vunpack.c.h.b16 %v76
      %v136 = vunpack.c.l.b16 %v77
      %v137 = vunpack.c.h.b16 %v77
      %v138 = vpack.c.b16 %v108, %v106
      %v139 = vpack.c.b16 %v109, %v107
      %v140 = vpack.c.b16 %v112, %v110
      %v141 = vpack.c.b16 %v113, %v111
      %v142 = vpack.c.b16 %v116, %v114
      %v143 = vpack.c.b16 %v117, %v115
      %v144 = vpack.c.b16 %v120, %v118
      %v145 = vpack.c.b16 %v121, %v119
      %v146 = vpack.c.b16 %v124, %v122
      %v147 = vpack.c.b16 %v125, %v123
      %v148 = vpack.c.b16 %v128, %v126
      %v149 = vpack.c.b16 %v129, %v127
      %v150 = vpack.c.b16 %v132, %v130
      %v151 = vpack.c.b16 %v133, %v131
      %v152 = vpack.c.b16 %v136, %v134
      %v153 = vpack.c.b16 %v137, %v135
      %170 = vmatprep.subr.bf16.mxu0 %v139
      %171 = vmatpush1.bf16.msra.mxu0 %v138
      %172 = vmatprep.subr.bf16.mxu0 %v141
      %173 = vmatpush1.bf16.msra.mxu0 %v140
      %174 = vmatprep.subr.bf16.mxu0 %v143
      %175 = vmatpush1.bf16.msra.mxu0 %v142
      %176 = vmatprep.subr.bf16.mxu0 %v145
      %177 = vmatpush1.bf16.msra.mxu0 %v144
      %178 = vmatprep.subr.bf16.mxu0 %v147
      %179 = vmatpush1.bf16.msra.mxu0 %v146
      %180 = vmatprep.subr.bf16.mxu0 %v149
      %181 = vmatpush1.bf16.msra.mxu0 %v148
      %182 = vmatprep.subr.bf16.mxu0 %v151
      %183 = vmatpush1.bf16.msra.mxu0 %v150
      %184 = vmatprep.subr.bf16.mxu0 %v153
      %185 = vmatpush1.bf16.msra.mxu0 %v152
      %186 = vmatprep.subr.bf16.mxu0 0
      %187 = vmatpush1.bf16.msra.mxu0 0
      %188 = vmatprep.subr.bf16.mxu0 0
      %189 = vmatpush1.bf16.msra.mxu0 0
      %190 = vmatprep.subr.bf16.mxu0 0
      %191 = vmatpush1.bf16.msra.mxu0 0
      %192 = vmatprep.subr.bf16.mxu0 0
      %193 = vmatpush1.bf16.msra.mxu0 0
      %194 = vmatprep.subr.bf16.mxu0 0
      %195 = vmatpush1.bf16.msra.mxu0 0
      %196 = vmatprep.subr.bf16.mxu0 0
      %197 = vmatpush1.bf16.msra.mxu0 0
      %198 = vmatprep.subr.bf16.mxu0 0
      %199 = vmatpush1.bf16.msra.mxu0 0
      %200 = vmatprep.subr.bf16.mxu0 0
      %201 = vmatpush1.bf16.msra.mxu0 0
      %202 = vmatprep.mubr.bf16.mxu0 0
      %203 = vmatmul.mubr.bf16.gmra.mrb[0].mxu0 %v60
      %v204 = vpop.f32.mrb[0].mxu0
      %v205 = vadd.f32 %v83, %v204
      %v206 = vpop.f32.mrb[0].mxu0
      %v207 = vadd.f32 %v87, %v206
      %v208 = vpop.f32.mrb[0].mxu0
      %v209 = vadd.f32 %v83, %v208
      %v210 = vpop.f32.mrb[0].mxu0
      %v211 = vadd.f32 %v87, %v210
      %212 = vmatprep.mubr.bf16.mxu0 0
      %213 = vmatmul.mubr.bf16.gmra.mrb[0].mxu0 %v61
      %v214 = vpop.f32.mrb[0].mxu0
      %v215 = vadd.f32 %v83, %v214
      %v216 = vpop.f32.mrb[0].mxu0
      %v217 = vadd.f32 %v87, %v216
      %v218 = vpop.f32.mrb[0].mxu0
      %v219 = vadd.f32 %v83, %v218
      %v220 = vpop.f32.mrb[0].mxu0
      %v221 = vadd.f32 %v87, %v220
      %222 = vdwg.mxu0
      %223 = vst [vmem:[#allocation8] sm:$0xff] %v205
      %224 = vst [vmem:[#allocation8 + $0x8] sm:$0xff] %v207
      %225 = vst [vmem:[#allocation8 + $0x10] sm:$0xff] %v209
      %226 = vst [vmem:[#allocation8 + $0x18] sm:$0xff] %v211
      %227 = vst [vmem:[#allocation8 + $0x20] sm:$0xff] %v215
      %228 = vst [vmem:[#allocation8 + $0x28] sm:$0xff] %v217
      %229 = vst [vmem:[#allocation8 + $0x30] sm:$0xff] %v219
      %230 = vst [vmem:[#allocation8 + $0x38] sm:$0xff] %v221
      %v231 = vpack.c.bf16 %v209, %v205
      %v232 = vpack.c.bf16 %v211, %v207
      %v233 = vpack.c.bf16 %v219, %v215
      %v234 = vpack.c.bf16 %v221, %v217
      %235 = vst [vmem:[#allocation2] sm:$0xff] %v231
      %236 = vst [vmem:[#allocation2 + $0x8] sm:$0xff] %v232
      %237 = vst [vmem:[#allocation2 + $0x10] sm:$0xff] %v233
      %238 = vst [vmem:[#allocation2 + $0x18] sm:$0xff] %v234
    $region33: #{_forward_impl.1} parent=1 // pred_fallthru
      _
    %v239 = vld [vmem:[#allocation2] sm:$0xff]
    %v240 = vld [vmem:[#allocation2 + $0x8] sm:$0xff]
    %v241 = vld [vmem:[#allocation2 + $0x10] sm:$0xff]
    %v242 = vld [vmem:[#allocation2 + $0x18] sm:$0xff]
    %v243 = vld [vmem:[#allocation6] sm:$0xff]
    %v244 = vld [vmem:[#allocation6 + $0x8] sm:$0xff]
    %v245 = vld [vmem:[#allocation6 + $0x10] sm:$0xff]
    %v246 = vld [vmem:[#allocation6 + $0x18] sm:$0xff]
    %v247 = vld [vmem:[#allocation6 + $0x20] sm:$0xff]
    %v248 = vld [vmem:[#allocation6 + $0x28] sm:$0xff]
    %v249 = vld [vmem:[#allocation6 + $0x30] sm:$0xff]
    %v250 = vld [vmem:[#allocation6 + $0x38] sm:$0xff]
    %v251 = vld [vmem:[#allocation6 + $0x40] sm:$0xff]
    %v252 = vld [vmem:[#allocation6 + $0x48] sm:$0xff]
    %v253 = vld [vmem:[#allocation6 + $0x50] sm:$0xff]
    %v254 = vld [vmem:[#allocation6 + $0x58] sm:$0xff]
    %v255 = vld [vmem:[#allocation6 + $0x60] sm:$0xff]
    %v256 = vld [vmem:[#allocation6 + $0x68] sm:$0xff]
    %v257 = vld [vmem:[#allocation6 + $0x70] sm:$0xff]
    %v258 = vld [vmem:[#allocation6 + $0x78] sm:$0xff]
    %v259 = vld [vmem:[#allocation6 + $0x80] sm:$0xff]
    %v260 = vld [vmem:[#allocation6 + $0x88] sm:$0xff]
    %v261 = vld [vmem:[#allocation6 + $0x90] sm:$0xff]
    %v262 = vld [vmem:[#allocation6 + $0x98] sm:$0xff]
    %v263 = vld [vmem:[#allocation6 + $0xa0] sm:$0xff]
    %v264 = vld [vmem:[#allocation6 + $0xa8] sm:$0xff]
    %v265 = vld [vmem:[#allocation6 + $0xb0] sm:$0xff]
    %v266 = vld [vmem:[#allocation6 + $0xb8] sm:$0xff]
    %v267 = vld [vmem:[#allocation6 + $0xc0] sm:$0xff]
    %v268 = vld [vmem:[#allocation6 + $0xc8] sm:$0xff]
    %v269 = vld [vmem:[#allocation6 + $0xd0] sm:$0xff]
    %v270 = vld [vmem:[#allocation6 + $0xd8] sm:$0xff]
    %v271 = vld [vmem:[#allocation6 + $0xe0] sm:$0xff]
    %v272 = vld [vmem:[#allocation6 + $0xe8] sm:$0xff]
    %v273 = vld [vmem:[#allocation6 + $0xf0] sm:$0xff]
    %v274 = vld [vmem:[#allocation6 + $0xf8] sm:$0xff]
    %v275 = vld [vmem:[%s4] sm:$0x3]
    %v277 = vlaneseq
    %v278 = vshrl.u32 %v277, 7
    %v279 = vsub.s32 0, %v278
    %v280 = vrot.slane %v275, %v279
    %v281 = vlaneseq
    %v282 = vshrl.u32 %v281, 7
    %v283 = vsub.s32 1, %v282
    %v284 = vrot.slane %v275, %v283
    %v319 = vunpack.c.l.b16 %v243
    %v320 = vunpack.c.h.b16 %v243
    %v321 = vunpack.c.l.b16 %v244
    %v322 = vunpack.c.h.b16 %v244
    %v323 = vunpack.c.l.b16 %v245
    %v324 = vunpack.c.h.b16 %v245
    %v325 = vunpack.c.l.b16 %v246
    %v326 = vunpack.c.h.b16 %v246
    %v327 = vunpack.c.l.b16 %v247
    %v328 = vunpack.c.h.b16 %v247
    %v329 = vunpack.c.l.b16 %v248
    %v330 = vunpack.c.h.b16 %v248
    %v331 = vunpack.c.l.b16 %v249
    %v332 = vunpack.c.h.b16 %v249
    %v333 = vunpack.c.l.b16 %v250
    %v334 = vunpack.c.h.b16 %v250
    %v335 = vunpack.c.l.b16 %v251
    %v336 = vunpack.c.h.b16 %v251
    %v337 = vunpack.c.l.b16 %v252
    %v338 = vunpack.c.h.b16 %v252
    %v339 = vunpack.c.l.b16 %v253
    %v340 = vunpack.c.h.b16 %v253
    %v341 = vunpack.c.l.b16 %v254
    %v342 = vunpack.c.h.b16 %v254
    %v343 = vunpack.c.l.b16 %v255
    %v344 = vunpack.c.h.b16 %v255
    %v345 = vunpack.c.l.b16 %v256
    %v346 = vunpack.c.h.b16 %v256
    %v347 = vunpack.c.l.b16 %v257
    %v348 = vunpack.c.h.b16 %v257
    %v349 = vunpack.c.l.b16 %v258
    %v350 = vunpack.c.h.b16 %v258
    %v351 = vunpack.c.l.b16 %v259
    %v352 = vunpack.c.h.b16 %v259
    %v353 = vunpack.c.l.b16 %v260
    %v354 = vunpack.c.h.b16 %v260
    %v355 = vunpack.c.l.b16 %v261
    %v356 = vunpack.c.h.b16 %v261
    %v357 = vunpack.c.l.b16 %v262
    %v358 = vunpack.c.h.b16 %v262
    %v359 = vunpack.c.l.b16 %v263
    %v360 = vunpack.c.h.b16 %v263
    %v361 = vunpack.c.l.b16 %v264
    %v362 = vunpack.c.h.b16 %v264
    %v363 = vunpack.c.l.b16 %v265
    %v364 = vunpack.c.h.b16 %v265
    %v365 = vunpack.c.l.b16 %v266
    %v366 = vunpack.c.h.b16 %v266
    %v367 = vunpack.c.l.b16 %v267
    %v368 = vunpack.c.h.b16 %v267
    %v369 = vunpack.c.l.b16 %v268
    %v370 = vunpack.c.h.b16 %v268
    %v371 = vunpack.c.l.b16 %v269
    %v372 = vunpack.c.h.b16 %v269
    %v373 = vunpack.c.l.b16 %v270
    %v374 = vunpack.c.h.b16 %v270
    %v375 = vunpack.c.l.b16 %v271
    %v376 = vunpack.c.h.b16 %v271
    %v377 = vunpack.c.l.b16 %v272
    %v378 = vunpack.c.h.b16 %v272
    %v379 = vunpack.c.l.b16 %v273
    %v380 = vunpack.c.h.b16 %v273
    %v381 = vunpack.c.l.b16 %v274
    %v382 = vunpack.c.h.b16 %v274
    %v383 = vpack.c.b16 %v321, %v319
    %v384 = vpack.c.b16 %v322, %v320
    %v385 = vpack.c.b16 %v325, %v323
    %v386 = vpack.c.b16 %v326, %v324
    %v387 = vpack.c.b16 %v329, %v327
    %v388 = vpack.c.b16 %v330, %v328
    %v389 = vpack.c.b16 %v333, %v331
    %v390 = vpack.c.b16 %v334, %v332
    %v391 = vpack.c.b16 %v337, %v335
    %v392 = vpack.c.b16 %v338, %v336
    %v393 = vpack.c.b16 %v341, %v339
    %v394 = vpack.c.b16 %v342, %v340
    %v395 = vpack.c.b16 %v345, %v343
    %v396 = vpack.c.b16 %v346, %v344
    %v397 = vpack.c.b16 %v349, %v347
    %v398 = vpack.c.b16 %v350, %v348
    %v399 = vpack.c.b16 %v353, %v351
    %v400 = vpack.c.b16 %v354, %v352
    %v401 = vpack.c.b16 %v357, %v355
    %v402 = vpack.c.b16 %v358, %v356
    %v403 = vpack.c.b16 %v361, %v359
    %v404 = vpack.c.b16 %v362, %v360
    %v405 = vpack.c.b16 %v365, %v363
    %v406 = vpack.c.b16 %v366, %v364
    %v407 = vpack.c.b16 %v369, %v367
    %v408 = vpack.c.b16 %v370, %v368
    %v409 = vpack.c.b16 %v373, %v371
    %v410 = vpack.c.b16 %v374, %v372
    %v411 = vpack.c.b16 %v377, %v375
    %v412 = vpack.c.b16 %v378, %v376
    %v413 = vpack.c.b16 %v381, %v379
    %v414 = vpack.c.b16 %v382, %v380
    %447 = vmatprep.subr.bf16.mxu0 %v384
    %448 = vmatpush1.bf16.msra.mxu0 %v383
    %449 = vmatprep.subr.bf16.mxu0 %v386
    %450 = vmatpush1.bf16.msra.mxu0 %v385
    %451 = vmatprep.subr.bf16.mxu0 %v388
    %452 = vmatpush1.bf16.msra.mxu0 %v387
    %453 = vmatprep.subr.bf16.mxu0 %v390
    %454 = vmatpush1.bf16.msra.mxu0 %v389
    %455 = vmatprep.subr.bf16.mxu0 %v392
    %456 = vmatpush1.bf16.msra.mxu0 %v391
    %457 = vmatprep.subr.bf16.mxu0 %v394
    %458 = vmatpush1.bf16.msra.mxu0 %v393
    %459 = vmatprep.subr.bf16.mxu0 %v396
    %460 = vmatpush1.bf16.msra.mxu0 %v395
    %461 = vmatprep.subr.bf16.mxu0 %v398
    %462 = vmatpush1.bf16.msra.mxu0 %v397
    %463 = vmatprep.subr.bf16.mxu0 %v400
    %464 = vmatpush1.bf16.msra.mxu0 %v399
    %465 = vmatprep.subr.bf16.mxu0 %v402
    %466 = vmatpush1.bf16.msra.mxu0 %v401
    %467 = vmatprep.subr.bf16.mxu0 %v404
    %468 = vmatpush1.bf16.msra.mxu0 %v403
    %469 = vmatprep.subr.bf16.mxu0 %v406
    %470 = vmatpush1.bf16.msra.mxu0 %v405
    %471 = vmatprep.subr.bf16.mxu0 %v408
    %472 = vmatpush1.bf16.msra.mxu0 %v407
    %473 = vmatprep.subr.bf16.mxu0 %v410
    %474 = vmatpush1.bf16.msra.mxu0 %v409
    %475 = vmatprep.subr.bf16.mxu0 %v412
    %476 = vmatpush1.bf16.msra.mxu0 %v411
    %477 = vmatprep.subr.bf16.mxu0 %v414
    %478 = vmatpush1.bf16.msra.mxu0 %v413
    %479 = vmatprep.mubr.bf16.mxu0 %v240
    %480 = vmatmul.mubr.bf16.gmra.mrb[0].mxu0 %v239
    %v481 = vpop.f32.mrb[0].mxu0
    %v482 = vadd.f32 %v280, %v481
    %v483 = vpop.f32.mrb[0].mxu0
    %v484 = vadd.f32 %v284, %v483
    %v485 = vpop.f32.mrb[0].mxu0
    %v486 = vadd.f32 %v280, %v485
    %v487 = vpop.f32.mrb[0].mxu0
    %v488 = vadd.f32 %v284, %v487
    %489 = vmatprep.mubr.bf16.mxu0 %v242
    %490 = vmatmul.mubr.bf16.gmra.mrb[0].mxu0 %v241
    %v491 = vpop.f32.mrb[0].mxu0
    %v492 = vadd.f32 %v280, %v491
    %v493 = vpop.f32.mrb[0].mxu0
    %v494 = vadd.f32 %v284, %v493
    %v495 = vpop.f32.mrb[0].mxu0
    %v496 = vadd.f32 %v280, %v495
    %v497 = vpop.f32.mrb[0].mxu0
    %v498 = vadd.f32 %v284, %v497
    %499 = vdwg.mxu0
    %500 = vst [vmem:[%s5] sm:$0xff] %v482
    %501 = vst [vmem:[%s5 + $0x8] sm:$0xff] %v484
    %502 = vst [vmem:[%s5 + $0x10] sm:$0xff] %v486
    %503 = vst [vmem:[%s5 + $0x18] sm:$0xff] %v488
    %504 = vst [vmem:[%s5 + $0x20] sm:$0xff] %v492
    %505 = vst [vmem:[%s5 + $0x28] sm:$0xff] %v494
    %506 = vst [vmem:[%s5 + $0x30] sm:$0xff] %v496
    %507 = vst [vmem:[%s5 + $0x38] sm:$0xff] %v498
    // Predicated region
    $region34: #{_forward_impl.1} parent=1 // pred_check
      _
    $region35: #{_forward_impl.1} parent=1 // pred_check_branch
      %509 = sbr.rel (0) target = $region37
    $region36: #{_forward_impl.1} parent=1 // pred_region
      _
    $region37: #{_forward_impl.1} parent=1 // pred_fallthru
      _
    // Predicated region
    $region38: #{_forward_impl.1} parent=1 // pred_check
      _
    $region39: #{_forward_impl.1} parent=1 // pred_check_branch
      %511 = sbr.rel (0) target = $region41
    $region40: #{_forward_impl.1} parent=1 // pred_region
      %s513 = ssub.s32 1024, 1024
      %514 = vsyncadd [#allocation5], %s513
      %s515 = sshll.u32 [#allocation8], 4
      %s516 = int_to_ptr.vmem [resolvable:$true] %s515
      %521 = dma.vmem_to_hbm [thread:$0]  %s516, 1024, %s6, [#allocation5], 256, 256, 16
    $region41: #{_forward_impl.1} parent=1 // pred_fallthru
      _
    // Predicated region
    $region42: #{_forward_impl.1} parent=1 // pred_check
      _
    $region43: #{_forward_impl.1} parent=1 // pred_check_branch
      %523 = sbr.rel (0) target = $region45
    $region44: #{_forward_impl.1} parent=1 // pred_region
      _
    $region45: #{_forward_impl.1} parent=1 // pred_fallthru
      _
    // Predicated region
    $region46: #{_forward_impl.1} parent=1 // pred_check
      _
    $region47: #{_forward_impl.1} parent=1 // pred_check_branch
      %525 = sbr.rel (0) target = $region49
    $region48: #{_forward_impl.1} parent=1 // pred_region
      %526 = dma.done [#allocation5], 1024
    $region49: #{_forward_impl.1} parent=1 // pred_fallthru
      _
    %527 = vsyncpa [#allocation4], 1
    %528 = vsyncpa [#allocation7], 1
    %529 = vsyncpa [#allocation5], 1

</llo_original>
